<compile_context>
chip_gen: v6e
topology: v6e:2x2x1
jax: 0.10.0
libtpu: 0.0.40
codegen_flags: <defaults>
</compile_context>

<pallas_src>
import functools

import jax
import jax.numpy as jnp
from jax.experimental import pallas as pl
from jax.experimental.pallas import tpu as pltpu


def _round_up(x, m):
    return ((x + m - 1) // m) * m


def _auto_tm(n):
    """Big tiles to amortize per-step overhead; keep grid length >= 2 when possible
    (v7x has 2 TensorCores), cap at 8192 to bound VMEM on every generation."""
    n128 = _round_up(max(n, 1), 128)
    if n128 <= 128:
        return 128                                  # tiny batch: one step is all we can do
    half = _round_up((n128 + 1) // 2, 128)
    return min(8192, half)


def _make_kernel(nz, num_classes, hpad):
    def kernel(z_ref, lbl_ref, wpack_ref, bpack_ref, out_ref):
        z = z_ref[...]                      # (nz, tm) f32, batch on lanes
        lbl = lbl_ref[...]                  # (1, tm)  i32
        tm = z.shape[-1]

        w1c = wpack_ref[0]                  # (H, W): [:, :nz]=w1z, [:, nz:nz+C]=clsb (embed+b1 folded)
        w2 = wpack_ref[1][:, :hpad]         # (H, H)
        w34 = wpack_ref[2][0:1, :hpad]      # (1, H)  folded w4 @ w3
        bp = bpack_ref[...]                 # (H, 2)
        b2 = bp[:, 0:1]                     # (H, 1)
        b34 = bp[0:1, 1:2]                  # (1, 1)  folded w4 @ b3 + b4

        # ---- layer 1: w1z @ z + clsb[:, label]  (b1 already folded into clsb) ----
        h = jnp.zeros((hpad, tm), jnp.float32)
        if nz <= 8:                          # tiny K: VPU broadcast-FMAs, skip the MXU
            for k in range(nz):
                h = h + w1c[:, k:k + 1] * z[k:k + 1, :]
        else:
            h = h + jnp.dot(w1c[:, :nz], z, preferred_element_type=jnp.float32)

        if num_classes <= 16:                # per-class select-and-add (one-hot FMA)
            for c in range(num_classes):
                mask = (lbl == c).astype(jnp.float32)             # (1, tm)
                h = h + w1c[:, nz + c:nz + c + 1] * mask
        else:
            onehot = (jax.lax.broadcasted_iota(jnp.int32, (num_classes, tm), 0)
                      == lbl).astype(jnp.float32)                 # (C, tm)
            h = h + jnp.dot(w1c[:, nz:nz + num_classes], onehot,
                            preferred_element_type=jnp.float32)

        h = jnp.tanh(h)                                                          # (H, tm)
        h = jnp.tanh(jnp.dot(w2, h, preferred_element_type=jnp.float32) + b2)    # (H, tm)
        out_ref[...] = jnp.dot(w34, h, preferred_element_type=jnp.float32) + b34  # (1, tm)

    return kernel


@functools.partial(jax.jit, static_argnames=("tm",))
def g_gaussian_forward(z, label, params, *, tm=None):
    """Fused Pallas forward. z: (N, nz) f32, label: (N,) int. Returns (N, 1) f32."""
    N, nz = z.shape
    num_classes, nz_e = params["embed"].shape
    assert nz_e == nz
    h_real = params["w1"].shape[0]                   # 10 in the reference module
    hpad = max(8, _round_up(h_real, 8))              # pad hidden width to a sublane multiple

    if tm is None:
        tm = _auto_tm(N)
    assert tm % 128 == 0, "batch tile must be a multiple of 128 (lane width)"
    n_pad = _round_up(N, tm)

    # ---- data: feature-major (batch on lanes); pad the ragged tail ----
    z_t = z.astype(jnp.float32).T                                   # (nz, N)
    lbl = label.astype(jnp.int32).reshape(1, N)                     # (1, N)
    if n_pad != N:
        z_t = jnp.pad(z_t, ((0, 0), (0, n_pad - N)))
        lbl = jnp.pad(lbl, ((0, 0), (0, n_pad - N)))                # pad label 0 (valid class; stripped)

    # ---- fold + pack constants (padded rows/cols are exact zeros) ----
    f32 = jnp.float32
    embed = params["embed"].astype(f32)                             # (C, nz)
    w1 = params["w1"].astype(f32)                                   # (h, 2*nz)
    b1 = params["b1"].astype(f32)                                   # (h,)
    w1z = w1[:, :nz]                                                # (h, nz)
    clsb = w1[:, nz:] @ embed.T + b1[:, None]                       # (h, C): embedding path + b1 folded
    w2 = params["w2"].astype(f32)
    b2 = params["b2"].astype(f32)
    w34 = params["w4"].astype(f32) @ params["w3"].astype(f32)       # (1, h): layers 3+4 folded
    b34 = params["w4"].astype(f32) @ params["b3"].astype(f32) + params["b4"].astype(f32)  # (1,)

    W = max(hpad, nz + num_classes)
    wpack = jnp.zeros((3, hpad, W), f32)
    wpack = wpack.at[0, :h_real, :nz].set(w1z)
    wpack = wpack.at[0, :h_real, nz:nz + num_classes].set(clsb)
    wpack = wpack.at[1, :h_real, :h_real].set(w2)
    wpack = wpack.at[2, 0, :h_real].set(w34[0])
    bpack = jnp.zeros((hpad, 2), f32)
    bpack = bpack.at[:h_real, 0].set(b2)
    bpack = bpack.at[0, 1].set(b34[0])

    grid = (n_pad // tm,)

    out_t = pl.pallas_call(
        _make_kernel(nz, num_classes, hpad),
        out_shape=jax.ShapeDtypeStruct((1, n_pad), jnp.float32),
        grid_spec=pltpu.PrefetchScalarGridSpec(
            num_scalar_prefetch=0,
            grid=grid,
            in_specs=[
                pl.BlockSpec((nz, tm), lambda i: (0, i)),           # z tile (feature-major)
                pl.BlockSpec((1, tm), lambda i: (0, i)),            # label tile
                pl.BlockSpec(wpack.shape, lambda i: (0, 0, 0)),     # packed weights (constant)
                pl.BlockSpec(bpack.shape, lambda i: (0, 0)),        # packed biases (constant)
            ],
            out_specs=pl.BlockSpec((1, tm), lambda i: (0, i)),
        ),
        compiler_params=pltpu.CompilerParams(
            dimension_semantics=("parallel",),              # megacore-shards the grid on v7x
            allow_input_fusion=[True, True, True, True],    # fuse transpose/pad into inputs
        ),
    )(z_t, lbl, wpack, bpack)

    # strip the batch padding, return (N, 1) like the PyTorch module
    return out_t[0, :N].reshape(N, 1)


# ----------------------------------------------------------------------------
# parameter init (mimics PyTorch defaults) and pure-JAX reference
# ----------------------------------------------------------------------------

def _init_linear(key, fan_in, fan_out):
    """PyTorch nn.Linear default: uniform(+-1/sqrt(fan_in)); weight stored (out, in)."""
    kw, kb = jax.random.split(key)
    bound = 1.0 / jnp.sqrt(jnp.float32(fan_in))
    w = jax.random.uniform(kw, (fan_out, fan_in), jnp.float32, -bound, bound)
    b = jax.random.uniform(kb, (fan_out,), jnp.float32, -bound, bound)
    return w, b


def make_params(key, nz, num_classes=3, hidden=10):
    keys = jax.random.split(key, 5)
    embed = jax.random.normal(keys[0], (num_classes, nz), jnp.float32)  # nn.Embedding default
    w1, b1 = _init_linear(keys[1], 2 * nz, hidden)
    w2, b2 = _init_linear(keys[2], hidden, hidden)
    w3, b3 = _init_linear(keys[3], hidden, hidden)
    w4, b4 = _init_linear(keys[4], hidden, 1)
    return dict(embed=embed, w1=w1, b1=b1, w2=w2, b2=b2, w3=w3, b3=b3, w4=w4, b4=b4)


def _reference_forward(z, label, p):
    e = p["embed"][label]                          # (N, nz)
    x = jnp.concatenate([z, e], axis=1)            # (N, 2*nz)
    h = jnp.tanh(x @ p["w1"].T + p["b1"])
    h = jnp.tanh(h @ p["w2"].T + p["b2"])
    h = h @ p["w3"].T + p["b3"]
    return h @ p["w4"].T + p["b4"]                 # (N, 1)


if __name__ == "__main__":
    key = jax.random.PRNGKey(0)
    k_z, k_l, k_p, k_z2, k_l2 = jax.random.split(key, 5)

    nz, num_classes = 2, 3
    params = make_params(k_p, nz=nz, num_classes=num_classes)

    # small batch (single grid step)
    N = 64
    z = jax.random.normal(k_z, (N, nz), jnp.float32)
    label = jax.random.randint(k_l, (N,), 0, num_classes, dtype=jnp.int32)
    out = g_gaussian_forward(z, label, params)
    jax.block_until_ready(out)
    ref = _reference_forward(z, label, params)
    assert out.shape == (N, 1)
    assert jnp.allclose(out, ref, atol=1e-5, rtol=1e-5)

    # ragged batch spanning 2 grid steps (exercises the tiling / megacore path)
    N2 = 300
    z2 = jax.random.normal(k_z2, (N2, nz), jnp.float32)
    label2 = jax.random.randint(k_l2, (N2,), 0, num_classes, dtype=jnp.int32)
    out2 = g_gaussian_forward(z2, label2, params)
    jax.block_until_ready(out2)
    ref2 = _reference_forward(z2, label2, params)
    assert out2.shape == (N2, 1)
    assert jnp.allclose(out2, ref2, atol=1e-5, rtol=1e-5)

    print("KERNEL_OK")
</pallas_src>

<mosaic_0001>
module attributes {stable_mosaic.version = 11 : i64} {
  func.func @kernel(%arg0: i32, %arg1: memref<2x128xf32, #tpu.memory_space<vmem>>, %arg2: memref<1x128xi32, #tpu.memory_space<vmem>>, %arg3: memref<3x16x16xf32, #tpu.memory_space<vmem>>, %arg4: memref<16x2xf32, #tpu.memory_space<vmem>>, %arg5: memref<1x128xf32, #tpu.memory_space<vmem>>) attributes {dimension_semantics = [#tpu.dimension_semantics<parallel>], iteration_bounds = array<i64: 1>, scalar_prefetch = 0 : i64, scratch_operands = 0 : i64, tpu.core_type = #tpu.core_type<tc>, window_params = [{transform_indices = @transform_0, window_bounds = array<i64: 2, 128>}, {transform_indices = @transform_1, window_bounds = array<i64: 1, 128>}, {pipeline_mode = #tpu.pipeline_mode<synchronous>, transform_indices = @transform_2, window_bounds = array<i64: 3, 16, 16>}, {pipeline_mode = #tpu.pipeline_mode<synchronous>, transform_indices = @transform_3, window_bounds = array<i64: 16, 2>}, {transform_indices = @transform_4, window_bounds = array<i64: 1, 128>}]} {
    %c0 = arith.constant 0 : index
    %c0_0 = arith.constant 0 : index
    %0 = vector.load %arg1[%c0, %c0_0] : memref<2x128xf32, #tpu.memory_space<vmem>>, vector<2x128xf32>
    %c0_1 = arith.constant 0 : index
    %c0_2 = arith.constant 0 : index
    %1 = vector.load %arg2[%c0_1, %c0_2] : memref<1x128xi32, #tpu.memory_space<vmem>>, vector<1x128xi32>
    %c0_3 = arith.constant 0 : index
    %c0_4 = arith.constant 0 : index
    %c0_5 = arith.constant 0 : index
    %2 = vector.load %arg3[%c0_3, %c0_4, %c0_5] : memref<3x16x16xf32, #tpu.memory_space<vmem>>, vector<1x16x16xf32>
    %3 = vector.shape_cast %2 : vector<1x16x16xf32> to vector<16x16xf32>
    %c1 = arith.constant 1 : index
    %c0_6 = arith.constant 0 : index
    %c0_7 = arith.constant 0 : index
    %4 = vector.load %arg3[%c1, %c0_6, %c0_7] : memref<3x16x16xf32, #tpu.memory_space<vmem>>, vector<1x16x16xf32>
    %5 = vector.shape_cast %4 : vector<1x16x16xf32> to vector<16x16xf32>
    %c2 = arith.constant 2 : index
    %c0_8 = arith.constant 0 : index
    %c0_9 = arith.constant 0 : index
    %6 = vector.load %arg3[%c2, %c0_8, %c0_9] : memref<3x16x16xf32, #tpu.memory_space<vmem>>, vector<1x16x16xf32>
    %7 = vector.shape_cast %6 : vector<1x16x16xf32> to vector<16x16xf32>
    %8 = vector.extract_strided_slice %7 {offsets = [0, 0], sizes = [1, 16], strides = [1, 1]} : vector<16x16xf32> to vector<1x16xf32>
    %c0_10 = arith.constant 0 : index
    %c0_11 = arith.constant 0 : index
    %9 = vector.load %arg4[%c0_10, %c0_11] : memref<16x2xf32, #tpu.memory_space<vmem>>, vector<16x2xf32>
    %10 = vector.extract_strided_slice %9 {offsets = [0, 0], sizes = [16, 1], strides = [1, 1]} : vector<16x2xf32> to vector<16x1xf32>
    %11 = vector.extract_strided_slice %9 {offsets = [0, 1], sizes = [1, 1], strides = [1, 1]} : vector<16x2xf32> to vector<1x1xf32>
    %cst = arith.constant 0.000000e+00 : f32
    %12 = vector.broadcast %cst : f32 to vector<16x128xf32>
    %13 = vector.extract_strided_slice %3 {offsets = [0, 0], sizes = [16, 1], strides = [1, 1]} : vector<16x16xf32> to vector<16x1xf32>
    %14 = vector.extract_strided_slice %0 {offsets = [0, 0], sizes = [1, 128], strides = [1, 1]} : vector<2x128xf32> to vector<1x128xf32>
    %15 = vector.broadcast %13 : vector<16x1xf32> to vector<16x128xf32>
    %16 = vector.broadcast %14 : vector<1x128xf32> to vector<16x128xf32>
    %17 = arith.mulf %15, %16 : vector<16x128xf32>
    %18 = arith.addf %12, %17 : vector<16x128xf32>
    %19 = vector.extract_strided_slice %3 {offsets = [0, 1], sizes = [16, 1], strides = [1, 1]} : vector<16x16xf32> to vector<16x1xf32>
    %20 = vector.extract_strided_slice %0 {offsets = [1, 0], sizes = [1, 128], strides = [1, 1]} : vector<2x128xf32> to vector<1x128xf32>
    %21 = vector.broadcast %19 : vector<16x1xf32> to vector<16x128xf32>
    %22 = vector.broadcast %20 : vector<1x128xf32> to vector<16x128xf32>
    %23 = arith.mulf %21, %22 : vector<16x128xf32>
    %24 = arith.addf %18, %23 : vector<16x128xf32>
    %c0_i32 = arith.constant 0 : i32
    %25 = vector.broadcast %c0_i32 : i32 to vector<1x128xi32>
    %26 = arith.cmpi eq, %1, %25 : vector<1x128xi32>
    %27 = arith.extui %26 : vector<1x128xi1> to vector<1x128xi32>
    %28 = arith.sitofp %27 : vector<1x128xi32> to vector<1x128xf32>
    %29 = vector.extract_strided_slice %3 {offsets = [0, 2], sizes = [16, 1], strides = [1, 1]} : vector<16x16xf32> to vector<16x1xf32>
    %30 = vector.broadcast %29 : vector<16x1xf32> to vector<16x128xf32>
    %31 = vector.broadcast %28 : vector<1x128xf32> to vector<16x128xf32>
    %32 = arith.mulf %30, %31 : vector<16x128xf32>
    %33 = arith.addf %24, %32 : vector<16x128xf32>
    %c1_i32 = arith.constant 1 : i32
    %34 = vector.broadcast %c1_i32 : i32 to vector<1x128xi32>
    %35 = arith.cmpi eq, %1, %34 : vector<1x128xi32>
    %36 = arith.extui %35 : vector<1x128xi1> to vector<1x128xi32>
    %37 = arith.sitofp %36 : vector<1x128xi32> to vector<1x128xf32>
    %38 = vector.extract_strided_slice %3 {offsets = [0, 3], sizes = [16, 1], strides = [1, 1]} : vector<16x16xf32> to vector<16x1xf32>
    %39 = vector.broadcast %38 : vector<16x1xf32> to vector<16x128xf32>
    %40 = vector.broadcast %37 : vector<1x128xf32> to vector<16x128xf32>
    %41 = arith.mulf %39, %40 : vector<16x128xf32>
    %42 = arith.addf %33, %41 : vector<16x128xf32>
    %c2_i32 = arith.constant 2 : i32
    %43 = vector.broadcast %c2_i32 : i32 to vector<1x128xi32>
    %44 = arith.cmpi eq, %1, %43 : vector<1x128xi32>
    %45 = arith.extui %44 : vector<1x128xi1> to vector<1x128xi32>
    %46 = arith.sitofp %45 : vector<1x128xi32> to vector<1x128xf32>
    %47 = vector.extract_strided_slice %3 {offsets = [0, 4], sizes = [16, 1], strides = [1, 1]} : vector<16x16xf32> to vector<16x1xf32>
    %48 = vector.broadcast %47 : vector<16x1xf32> to vector<16x128xf32>
    %49 = vector.broadcast %46 : vector<1x128xf32> to vector<16x128xf32>
    %50 = arith.mulf %48, %49 : vector<16x128xf32>
    %51 = arith.addf %42, %50 : vector<16x128xf32>
    %52 = math.tanh %51 : vector<16x128xf32>
    %cst_12 = arith.constant dense<0.000000e+00> : vector<16x128xf32>
    %53 = tpu.matmul %5, %52, %cst_12 {dimension_numbers = #tpu.dot_dimension_numbers<[1], [0], [0], [1], [0, 0, 1, 1], [], []>} : vector<16x16xf32>, vector<16x128xf32>, vector<16x128xf32> -> vector<16x128xf32>
    %54 = vector.broadcast %10 : vector<16x1xf32> to vector<16x128xf32>
    %55 = arith.addf %53, %54 : vector<16x128xf32>
    %56 = math.tanh %55 : vector<16x128xf32>
    %cst_13 = arith.constant dense<0.000000e+00> : vector<1x128xf32>
    %57 = tpu.matmul %8, %56, %cst_13 {dimension_numbers = #tpu.dot_dimension_numbers<[1], [0], [0], [1], [0, 0, 1, 1], [], []>} : vector<1x16xf32>, vector<16x128xf32>, vector<1x128xf32> -> vector<1x128xf32>
    %58 = vector.broadcast %11 : vector<1x1xf32> to vector<1x128xf32>
    %59 = arith.addf %57, %58 : vector<1x128xf32>
    %c0_14 = arith.constant 0 : index
    %c0_15 = arith.constant 0 : index
    %60 = vector.load %arg5[%c0_14, %c0_15] : memref<1x128xf32, #tpu.memory_space<vmem>>, vector<1x128xf32>
    tpu.vector_store %arg5[%c0_14, %c0_15], %59 {strides = array<i32>} : memref<1x128xf32, #tpu.memory_space<vmem>>, vector<1x128xf32>,
    return
  }
  func.func @transform_0(%arg0: i32) -> (i32, i32) {
    %c0_i32 = arith.constant 0 : i32
    %c0_i32_0 = arith.constant 0 : i32
    return %c0_i32, %arg0 : i32, i32
  }
  func.func @transform_1(%arg0: i32) -> (i32, i32) {
    %c0_i32 = arith.constant 0 : i32
    %c0_i32_0 = arith.constant 0 : i32
    return %c0_i32, %arg0 : i32, i32
  }
  func.func @transform_2(%arg0: i32) -> (i32, i32, i32) {
    %c0_i32 = arith.constant 0 : i32
    %c0_i32_0 = arith.constant 0 : i32
    %c0_i32_1 = arith.constant 0 : i32
    %c0_i32_2 = arith.constant 0 : i32
    return %c0_i32, %c0_i32_0, %c0_i32_1 : i32, i32, i32
  }
  func.func @transform_3(%arg0: i32) -> (i32, i32) {
    %c0_i32 = arith.constant 0 : i32
    %c0_i32_0 = arith.constant 0 : i32
    %c0_i32_1 = arith.constant 0 : i32
    return %c0_i32, %c0_i32_0 : i32, i32
  }
  func.func @transform_4(%arg0: i32) -> (i32, i32) {
    %c0_i32 = arith.constant 0 : i32
    %c0_i32_0 = arith.constant 0 : i32
    return %c0_i32, %arg0 : i32, i32
  }
}

</mosaic_0001>

<llo_original>
// kernel: g_gaussian_forward.2
$region0: #{g_gaussian_forward.2}
  #allocation0 [shape = 'u32[]', space=smem, size = 0x4, offset = 0x4, fixed_abs, tag = 'smem constant byte address 0x4 - core index']
  #allocation1 [shape = 'u32[144,128]{1,0:T(1,128)}', space=vmem, size = 0x12000, scoped, tag = 'internal scratch']
  #allocation2 [shape = 'u32[2048]{0}', space=vmem, size = 0x2000, scoped, tag = 'scoped memory for g_gaussian_forward.2']
  #allocation3 [shape = 'u32[2048]{0}', space=vmem, size = 0x2000, scoped, tag = 'scoped memory for g_gaussian_forward.2']
  #allocation4 [shape = 'u32[2048]{0}', space=vmem, size = 0x2000, scoped, tag = 'scoped memory for g_gaussian_forward.2']
  #allocation5 [shape = 'u32[2048]{0}', space=vmem, size = 0x2000, scoped, tag = 'scoped memory for g_gaussian_forward.2']
  #allocation6 [shape = 'u32[2048]{0}', space=vmem, size = 0x2000, scoped, tag = 'scoped memory for g_gaussian_forward.2']
  #allocation7 [shape = 'u32[2048]{0}', space=vmem, size = 0x2000, scoped, tag = 'scoped memory for g_gaussian_forward.2']
  #allocation8 [shape = 'u32[2048]{0}', space=vmem, size = 0x2000, scoped, tag = 'scoped memory for g_gaussian_forward.2']
  #allocation9 [shape = 'u32[2048]{0}', space=vmem, size = 0x2000, scoped, tag = 'scoped memory for g_gaussian_forward.2']
  #allocation10 [shape = 'u32[2048]{0}', space=vmem, size = 0x2000, scoped, tag = 'scoped memory for g_gaussian_forward.2']
  #allocation11 [shape = 'u32[2048]{0}', space=vmem, size = 0x2000, scoped, tag = 'scoped memory for g_gaussian_forward.2']
  %s0 = inlined_call_operand.vmem [shape: f32[3,16,16], index: 0, kind: input, shape index: {}]
  %s1 = inlined_call_operand.vmem [shape: f32[16,2], index: 1, kind: input, shape index: {}]
  %s2 = inlined_call_operand.vmem [shape: f32[2,64], index: 2, kind: input, shape index: {}]
  %s3 = inlined_call_operand.<no memory space> [shape: f32[], index: 3, kind: input, shape index: {}]
  %s4 = inlined_call_operand.vmem [shape: s32[1,64], index: 4, kind: input, shape index: {}]
  %s5 = inlined_call_operand.<no memory space> [shape: s32[], index: 5, kind: input, shape index: {}]
  %s6 = inlined_call_operand.vmem [shape: f32[1,128], index: 6, kind: output, shape index: {}]
  %s7 = sld [smem:[#allocation0]]
  $region26: #{g_gaussian_forward.2} parent=0
    _
  %s9 = ssub.s32 1, %s7
  %s10 = scalar_select 0, %s9, %s7
  %v11 = vstv %s3
  %v12 = vstv %s5
  $region1: #{g_gaussian_forward.2} parent=0
    #allocation12 [shape = 'u8[1024]{0}', space=vmem, size = 0x400, dematerialized = true, scoped, tag = 'FusionAdapter Buffer %fusion.2 = f32[2,128]{1,0:T(2,128)} fusion(%param_2.11, %param_3.2), kind=kLoop, calls=%fused_computation.4.clone, metadata={op_name="jit(g_gaussian_forward)/jit(_pad)/pad" stack_frame_id=11}']
    #allocation13 [shape = 'u8[512]{0}', space=vmem, size = 0x400, dematerialized = true, scoped, tag = 'FusionAdapter Buffer %fusion.5 = s32[1,128]{1,0:T(1,128)} fusion(%param_4.1, %param_5), kind=kLoop, calls=%fused_computation.9.clone, metadata={op_name="jit(g_gaussian_forward)/jit(_pad)/pad" stack_frame_id=12}']
    // Predicated region
    $region2: #{g_gaussian_forward.2} parent=1 // pred_check
      _
    $region3: #{g_gaussian_forward.2} parent=1 // pred_check_branch
      %14 = sbr.rel (0) target = $region5
    $region4: #{g_gaussian_forward.2} parent=1 // pred_region
      _
    $region5: #{g_gaussian_forward.2} parent=1 // pred_fallthru
      _
    // Predicated region
    $region6: #{g_gaussian_forward.2} parent=1 // pred_check
      _
    $region7: #{g_gaussian_forward.2} parent=1 // pred_check_branch
      %16 = sbr.rel (0) target = $region9
    $region8: #{g_gaussian_forward.2} parent=1 // pred_region
      _
    $region9: #{g_gaussian_forward.2} parent=1 // pred_fallthru
      _
    // Predicated region
    $region10: #{g_gaussian_forward.2} parent=1 // pred_check
      _
    $region11: #{g_gaussian_forward.2} parent=1 // pred_check_branch
      %18 = sbr.rel (0) target = $region13
    $region12: #{g_gaussian_forward.2} parent=1 // pred_region
      _
    $region13: #{g_gaussian_forward.2} parent=1 // pred_fallthru
      _
    // Predicated region
    $region14: #{g_gaussian_forward.2} parent=1 // pred_check
      _
    $region15: #{g_gaussian_forward.2} parent=1 // pred_check_branch
      %20 = sbr.rel (0) target = $region17
    $region16: #{g_gaussian_forward.2} parent=1 // pred_region
      _
    $region17: #{g_gaussian_forward.2} parent=1 // pred_fallthru
      _
    %v21 = vld [vmem:[%s2] sm:$0x3]
    %v22 = vlaneseq
    %v23 = vshrl.u32 %v22, 7
    %vm25 = vcmp.lt.s32.totalorder %v23, 2
    %v26 = vsel %vm25, %v21, %v11
    %v27 = vlaneseq
    %v28 = vand.u32 %v27, 127
    %vm30 = vcmp.lt.s32.totalorder %v28, 64
    %v31 = vsel %vm30, %v26, %v11
    %s33 = ssub.s32 4, 1
    %34 = vst [vmem:[#allocation12] sm:%s33] %v31
    %v35 = vld [vmem:[%s4] sm:$0x1]
    %v36 = vlaneseq
    %v37 = vshrl.u32 %v36, 7
    %vm39 = vcmp.lt.s32.totalorder %v37, 1
    %v40 = vsel %vm39, %v35, %v12
    %v41 = vlaneseq
    %v42 = vand.u32 %v41, 127
    %vm44 = vcmp.lt.s32.totalorder %v42, 64
    %v45 = vsel %vm44, %v40, %v12
    %s47 = ssub.s32 2, 1
    %48 = vst [vmem:[#allocation13] sm:%s47] %v45
    %v49 = vld [vmem:[#allocation12] sm:$0x3]
    %v50 = vld [vmem:[#allocation13] sm:$0x1]
    %v51 = vld [vmem:[%s0] sm:$0xff]
    %v52 = vld [vmem:[%s0 + $0x8] sm:$0xff]
    %s53 = scalar_lea.vmem %s0, 16
    %v54 = vld [vmem:[%s53] sm:$0xff]
    %v55 = vld [vmem:[%s53 + $0x8] sm:$0xff]
    %s56 = scalar_lea.vmem %s0, 32
    %v57 = vld [vmem:[%s56] sm:$0xff]
    %v58 = vld [vmem:[%s1] sm:$0xff]
    %v59 = vld [vmem:[%s1 + $0x8] sm:$0xff]
    %61 = vset.pattern.permute.xlu0 0
    %62 = vperm.xlu0 %61, %v51
    %v63 = vpop.permute.xlu0 %62
    %66 = vset.pattern.permute.xlu0 0
    %67 = vperm.xlu0 %66, %v52
    %v68 = vpop.permute.xlu0 %67
    %v70 = vlaneseq
    %v71 = vshrl.u32 %v70, 7
    %v72 = vsub.s32 0, %v71
    %v73 = vrot.slane %v49, %v72
    %v74 = vmul.f32 %v63, %v73
    %v75 = vmul.f32 %v68, %v73
    %v76 = vadd.f32 %v74, 0.0
    %v77 = vadd.f32 %v75, 0.0
    %78 = vset.pattern.permute.xlu0 1
    %79 = vperm.xlu0 %78, %v51
    %v80 = vpop.permute.xlu0 %79
    %82 = vset.pattern.permute.xlu0 1
    %83 = vperm.xlu0 %82, %v52
    %v84 = vpop.permute.xlu0 %83
    %v86 = vlaneseq
    %v87 = vshrl.u32 %v86, 7
    %v88 = vsub.s32 1, %v87
    %v89 = vrot.slane %v49, %v88
    %v90 = vmul.f32 %v80, %v89
    %v91 = vmul.f32 %v84, %v89
    %v92 = vadd.f32 %v76, %v90
    %v93 = vadd.f32 %v77, %v91
    %vm94 = vcmp.eq.s32.totalorder %v50, 0
    %v95 = vsel %vm94, 1, 0
    %v96 = vcvt.s32.f32 %v95
    %97 = vset.pattern.permute.xlu0 2
    %98 = vperm.xlu0 %97, %v51
    %v99 = vpop.permute.xlu0 %98
    %101 = vset.pattern.permute.xlu0 2
    %102 = vperm.xlu0 %101, %v52
    %v103 = vpop.permute.xlu0 %102
    %v106 = vlaneseq
    %v107 = vshrl.u32 %v106, 7
    %v108 = vsub.s32 0, %v107
    %v109 = vrot.slane %v96, %v108
    %v111 = vmul.f32 %v99, %v109
    %v112 = vmul.f32 %v103, %v109
    %v113 = vadd.f32 %v92, %v111
    %v114 = vadd.f32 %v93, %v112
    %vm115 = vcmp.eq.s32.totalorder %v50, 1
    %v116 = vsel %vm115, 1, 0
    %v117 = vcvt.s32.f32 %v116
    %118 = vset.pattern.permute.xlu0 3
    %119 = vperm.xlu0 %118, %v51
    %v120 = vpop.permute.xlu0 %119
    %122 = vset.pattern.permute.xlu0 3
    %123 = vperm.xlu0 %122, %v52
    %v124 = vpop.permute.xlu0 %123
    %v127 = vlaneseq
    %v128 = vshrl.u32 %v127, 7
    %v129 = vsub.s32 0, %v128
    %v130 = vrot.slane %v117, %v129
    %v132 = vmul.f32 %v120, %v130
    %v133 = vmul.f32 %v124, %v130
    %v134 = vadd.f32 %v113, %v132
    %v135 = vadd.f32 %v114, %v133
    %vm136 = vcmp.eq.s32.totalorder %v50, 2
    %v137 = vsel %vm136, 1, 0
    %v138 = vcvt.s32.f32 %v137
    %139 = vset.pattern.permute.xlu0 4
    %140 = vperm.xlu0 %139, %v51
    %v141 = vpop.permute.xlu0 %140
    %143 = vset.pattern.permute.xlu0 4
    %144 = vperm.xlu0 %143, %v52
    %v145 = vpop.permute.xlu0 %144
    %v148 = vlaneseq
    %v149 = vshrl.u32 %v148, 7
    %v150 = vsub.s32 0, %v149
    %v151 = vrot.slane %v138, %v150
    %v153 = vmul.f32 %v141, %v151
    %v154 = vmul.f32 %v145, %v151
    %v155 = vadd.f32 %v134, %v153
    %v156 = vadd.f32 %v135, %v154
    %v157 = vtanh.pop %v155
    %v158 = vtanh.pop %v156
    %160 = vset.pattern.permute.xlu0 0
    %161 = vperm.xlu0 %160, %v58
    %v162 = vpop.permute.xlu0 %161
    %165 = vset.pattern.permute.xlu0 0
    %166 = vperm.xlu0 %165, %v59
    %v167 = vpop.permute.xlu0 %166
    %vm169 = vcmask 130048
    %v171 = vsel %vm169, %v54, 0
    %v174 = vsel %vm169, %v55, 0
    %176 = vmatprep.subr.mxu0 0.0
    %177 = vmatpush1.msra.mxu0 0.0
    %178 = vmatprep.subr.mxu0 0.0
    %179 = vmatpush1.msra.mxu0 0.0
    %180 = vmatprep.subr.mxu0 0.0
    %181 = vmatpush1.msra.mxu0 0.0
    %182 = vmatprep.subr.mxu0 0.0
    %183 = vmatpush1.msra.mxu0 0.0
    %184 = vmatprep.subr.mxu0 0.0
    %185 = vmatpush1.msra.mxu0 0.0
    %186 = vmatprep.subr.mxu0 0.0
    %187 = vmatpush1.msra.mxu0 0.0
    %188 = vmatprep.subr.mxu0 0.0
    %189 = vmatpush1.msra.mxu0 0.0
    %190 = vmatprep.subr.mxu0 0.0
    %191 = vmatpush1.msra.mxu0 0.0
    %192 = vmatprep.subr.mxu0 0.0
    %193 = vmatpush1.msra.mxu0 0.0
    %194 = vmatprep.subr.mxu0 0.0
    %195 = vmatpush1.msra.mxu0 0.0
    %196 = vmatprep.subr.mxu0 0.0
    %197 = vmatpush1.msra.mxu0 0.0
    %198 = vmatprep.subr.mxu0 0.0
    %199 = vmatpush1.msra.mxu0 0.0
    %200 = vmatprep.subr.mxu0 0.0
    %201 = vmatpush1.msra.mxu0 0.0
    %202 = vmatprep.subr.mxu0 0.0
    %203 = vmatpush1.msra.mxu0 0.0
    %204 = vmatprep.subr.mxu0 0.0
    %205 = vmatpush1.msra.mxu0 %v158
    %206 = vmatprep.subr.mxu0 0.0
    %207 = vmatpush1.msra.mxu0 %v157
    %208 = vmatprep.subr.mxu0 0.0
    %209 = vmatpush2.msra.mxu0 0.0
    %210 = vmatprep.subr.mxu0 0.0
    %211 = vmatpush2.msra.mxu0 0.0
    %212 = vmatprep.subr.mxu0 0.0
    %213 = vmatpush2.msra.mxu0 0.0
    %214 = vmatprep.subr.mxu0 0.0
    %215 = vmatpush2.msra.mxu0 0.0
    %216 = vmatprep.subr.mxu0 0.0
    %217 = vmatpush2.msra.mxu0 0.0
    %218 = vmatprep.subr.mxu0 0.0
    %219 = vmatpush2.msra.mxu0 0.0
    %220 = vmatprep.subr.mxu0 0.0
    %221 = vmatpush2.msra.mxu0 0.0
    %222 = vmatprep.subr.mxu0 0.0
    %223 = vmatpush2.msra.mxu0 0.0
    %224 = vmatprep.subr.mxu0 0.0
    %225 = vmatpush2.msra.mxu0 0.0
    %226 = vmatprep.subr.mxu0 0.0
    %227 = vmatpush2.msra.mxu0 0.0
    %228 = vmatprep.subr.mxu0 0.0
    %229 = vmatpush2.msra.mxu0 0.0
    %230 = vmatprep.subr.mxu0 0.0
    %231 = vmatpush2.msra.mxu0 0.0
    %232 = vmatprep.subr.mxu0 0.0
    %233 = vmatpush2.msra.mxu0 0.0
    %234 = vmatprep.subr.mxu0 0.0
    %235 = vmatpush2.msra.mxu0 0.0
    %236 = vmatprep.subr.mxu0 0.0
    %237 = vmatpush2.msra.mxu0 0.0
    %238 = vmatprep.subr.mxu0 0.0
    %239 = vmatpush2.msra.mxu0 0.0
    %240 = vmatprep.mubr.f32.mxu0 0.0
    %241 = vmatmul.mubr.f32.gmra.mxu0 %v171
    %v242 = vpop.f32.mrf.mxu0
    %v243 = vadd.f32 %v162, %v242
    %v244 = vpop.f32.mrf.mxu0
    %245 = vmatprep.mubr.f32.mxu0 0.0
    %246 = vmatmul.mubr.f32.gmra.mxu0 %v174
    %v247 = vpop.f32.mrf.mxu0
    %v248 = vadd.f32 %v167, %v247
    %v249 = vpop.f32.mrf.mxu0
    %250 = vdwg.mxu0
    %v251 = vtanh.pop %v243
    %v252 = vtanh.pop %v248
    %253 = vset.pattern.permute.xlu0 1
    %254 = vperm.xlu0 %253, %v58
    %v255 = vpop.permute.xlu0 %254
    %v258 = vsel %vm169, %v57, 0
    %260 = vmatprep.subr.mxu0 0.0
    %261 = vmatpush1.msra.mxu0 0.0
    %262 = vmatprep.subr.mxu0 0.0
    %263 = vmatpush1.msra.mxu0 0.0
    %264 = vmatprep.subr.mxu0 0.0
    %265 = vmatpush1.msra.mxu0 0.0
    %266 = vmatprep.subr.mxu0 0.0
    %267 = vmatpush1.msra.mxu0 0.0
    %268 = vmatprep.subr.mxu0 0.0
    %269 = vmatpush1.msra.mxu0 0.0
    %270 = vmatprep.subr.mxu0 0.0
    %271 = vmatpush1.msra.mxu0 0.0
    %272 = vmatprep.subr.mxu0 0.0
    %273 = vmatpush1.msra.mxu0 0.0
    %274 = vmatprep.subr.mxu0 0.0
    %275 = vmatpush1.msra.mxu0 0.0
    %276 = vmatprep.subr.mxu0 0.0
    %277 = vmatpush1.msra.mxu0 0.0
    %278 = vmatprep.subr.mxu0 0.0
    %279 = vmatpush1.msra.mxu0 0.0
    %280 = vmatprep.subr.mxu0 0.0
    %281 = vmatpush1.msra.mxu0 0.0
    %282 = vmatprep.subr.mxu0 0.0
    %283 = vmatpush1.msra.mxu0 0.0
    %284 = vmatprep.subr.mxu0 0.0
    %285 = vmatpush1.msra.mxu0 0.0
    %286 = vmatprep.subr.mxu0 0.0
    %287 = vmatpush1.msra.mxu0 0.0
    %288 = vmatprep.subr.mxu0 0.0
    %289 = vmatpush1.msra.mxu0 %v252
    %290 = vmatprep.subr.mxu0 0.0
    %291 = vmatpush1.msra.mxu0 %v251
    %292 = vmatprep.subr.mxu0 0.0
    %293 = vmatpush2.msra.mxu0 0.0
    %294 = vmatprep.subr.mxu0 0.0
    %295 = vmatpush2.msra.mxu0 0.0
    %296 = vmatprep.subr.mxu0 0.0
    %297 = vmatpush2.msra.mxu0 0.0
    %298 = vmatprep.subr.mxu0 0.0
    %299 = vmatpush2.msra.mxu0 0.0
    %300 = vmatprep.subr.mxu0 0.0
    %301 = vmatpush2.msra.mxu0 0.0
    %302 = vmatprep.subr.mxu0 0.0
    %303 = vmatpush2.msra.mxu0 0.0
    %304 = vmatprep.subr.mxu0 0.0
    %305 = vmatpush2.msra.mxu0 0.0
    %306 = vmatprep.subr.mxu0 0.0
    %307 = vmatpush2.msra.mxu0 0.0
    %308 = vmatprep.subr.mxu0 0.0
    %309 = vmatpush2.msra.mxu0 0.0
    %310 = vmatprep.subr.mxu0 0.0
    %311 = vmatpush2.msra.mxu0 0.0
    %312 = vmatprep.subr.mxu0 0.0
    %313 = vmatpush2.msra.mxu0 0.0
    %314 = vmatprep.subr.mxu0 0.0
    %315 = vmatpush2.msra.mxu0 0.0
    %316 = vmatprep.subr.mxu0 0.0
    %317 = vmatpush2.msra.mxu0 0.0
    %318 = vmatprep.subr.mxu0 0.0
    %319 = vmatpush2.msra.mxu0 0.0
    %320 = vmatprep.subr.mxu0 0.0
    %321 = vmatpush2.msra.mxu0 0.0
    %322 = vmatprep.subr.mxu0 0.0
    %323 = vmatpush2.msra.mxu0 0.0
    %324 = vmatprep.mubr.f32.mxu0 0.0
    %325 = vmatmul.mubr.f32.gmra.mxu0 %v258
    %v326 = vpop.f32.mrf.mxu0
    %v327 = vadd.f32 %v255, %v326
    %v328 = vpop.f32.mrf.mxu0
    %329 = vdwg.mxu0
    %330 = vst [vmem:[%s6] sm:$0x1] %v327
    // Predicated region
    $region18: #{g_gaussian_forward.2} parent=1 // pred_check
      _
    $region19: #{g_gaussian_forward.2} parent=1 // pred_check_branch
      %332 = sbr.rel (0) target = $region21
    $region20: #{g_gaussian_forward.2} parent=1 // pred_region
      _
    $region21: #{g_gaussian_forward.2} parent=1 // pred_fallthru
      _
    // Predicated region
    $region22: #{g_gaussian_forward.2} parent=1 // pred_check
      _
    $region23: #{g_gaussian_forward.2} parent=1 // pred_check_branch
      %334 = sbr.rel (0) target = $region25
    $region24: #{g_gaussian_forward.2} parent=1 // pred_region
      _
    $region25: #{g_gaussian_forward.2} parent=1 // pred_fallthru
      _

</llo_original>
